<compile_context>
chip_gen: v5e
topology: v5e:2x2
jax: 0.10.0
libtpu: 0.0.40
codegen_flags: <defaults>
</compile_context>

<pallas_src>
import jax
import jax.numpy as jnp
from jax import lax
from jax.experimental import pallas as pl
from jax.experimental.pallas import tpu as pltpu

KERNEL = 5
PAD = 2
EPS = 1e-5
_VMEM_LIMIT = 32 * 1024 * 1024          # leave headroom on v7x (64 MiB / TensorCore)


# --------------------------------------------------------------------------- helpers
def _elu(v):
    # PyTorch ELU(alpha=1).  exp(v)-1 instead of expm1: deviation <= ~1.2e-7, lowering-safe.
    return jnp.where(v > 0, v, jnp.exp(v) - 1.0)


def _roll_lanes(x, off):
    """y[:, j] = x[:, (j + off) % n] for a static offset (lowers to lane shifts)."""
    n = x.shape[-1]
    k = off % n
    if k == 0:
        return x
    return jnp.concatenate([x[:, k:], x[:, :k]], axis=-1)


def _pick_tile(s, target):
    """Largest multiple-of-128 divisor of s <= target, preferring >= 2 grid steps."""
    if s <= 128:
        return s
    t = min(target, s)
    t -= t % 128
    while t >= 128:
        if s % t == 0 and not (t == s and s >= 256):
            return t
        t -= 128
    return s


def _pick_td(ds, target=4):
    """Depth tile for the elementwise epilogue kernels (divisor of ds)."""
    td = min(target, ds)
    while ds % td:
        td -= 1
    return td


def _bn_scale_shift(sum_c, sq_c, count, gamma, beta):
    # Biased batch variance (training mode).  E[x^2]-E[x]^2 in f32 from f32 partial sums;
    # activations here are near zero-mean so cancellation is benign (see review note).
    mean = sum_c / count
    var = sq_c / count - mean * mean
    scale = gamma * lax.rsqrt(var + EPS)
    shift = beta - mean * scale
    return (scale.reshape(-1, 1).astype(jnp.float32),
            shift.reshape(-1, 1).astype(jnp.float32))


# --------------------------------------------------------------- Pallas kernel bodies
def _upconv_kernel(x_ref, w_ref, b_ref, y_ref, st_ref):
    # (8*Oh, Cin)bf16 @ (Cin, TS)bf16 -> (8*Oh, TS) f32 on the MXU, + bias (tap-major rows).
    x = x_ref[...].astype(jnp.bfloat16)
    y = jnp.dot(w_ref[...], x, preferred_element_type=jnp.float32) + b_ref[...]
    y_ref[...] = y
    s = jnp.sum(y, axis=1, keepdims=True)
    q = jnp.sum(y * y, axis=1, keepdims=True)
    st_ref[...] = jnp.concatenate([s, q], axis=1)     # packed (rows, 2) partial BN stats


def _cat_kernel(up_ref, skip_ref, scale_ref, shift_ref, dmask_ref, hwm_ref, o_ref):
    # fused: BN-apply + ELU on the upsampled half (border re-zeroed), Dropout3d mask on the
    # skip half, channel concat; writes the padded depth-major layout consumed by the convs.
    up = _elu(up_ref[...] * scale_ref[...] + shift_ref[...]) * hwm_ref[...]
    sk = skip_ref[...] * dmask_ref[...]
    o_ref[...] = jnp.concatenate([up, sk], axis=1)


def _bn_elu_kernel(y_ref, scale_ref, shift_ref, hwm_ref, o_ref):
    # BN-apply + ELU, border re-zeroed, stored bf16 (next conv casts to bf16 anyway).
    o_ref[...] = (_elu(y_ref[...] * scale_ref[...] + shift_ref[...])
                  * hwm_ref[...]).astype(o_ref.dtype)


def _bn_elu_res_kernel(y_ref, res_ref, scale_ref, shift_ref, o_ref):
    # last LUConv: ELU(BN(conv)) fused with the block's residual add + final ELU.
    t = _elu(y_ref[...] * scale_ref[...] + shift_ref[...])
    o_ref[...] = _elu(t + res_ref[...])


# ------------------------------------------------------------------ pallas_call wrappers
def _upconv(x_flat, w_up, b_up, *, tile_target=2048):
    """x_flat [N,Cin,S] f32, w_up [8*Oh,Cin] bf16 -> (y [N,8*Oh,S] f32, stats [N,nt,8*Oh,2])."""
    N, Cin, S = x_flat.shape
    R = w_up.shape[0]
    ts = _pick_tile(S, tile_target)
    nt = S // ts
    b2 = b_up.reshape(R, 1).astype(jnp.float32)
    return pl.pallas_call(
        _upconv_kernel,
        grid=(N, nt),
        in_specs=[
            pl.BlockSpec((None, Cin, ts), lambda n, t: (n, 0, t)),
            pl.BlockSpec((R, Cin), lambda n, t: (0, 0)),
            pl.BlockSpec((R, 1), lambda n, t: (0, 0)),
        ],
        out_specs=[
            pl.BlockSpec((None, R, ts), lambda n, t: (n, 0, t)),
            pl.BlockSpec((None, None, R, 2), lambda n, t: (n, t, 0, 0)),
        ],
        out_shape=(
            jax.ShapeDtypeStruct((N, R, S), jnp.float32),
            jax.ShapeDtypeStruct((N, nt, R, 2), jnp.float32),
        ),
        compiler_params=pltpu.CompilerParams(
            dimension_semantics=("parallel", "parallel"),
            vmem_limit_bytes=_VMEM_LIMIT),
    )(x_flat, w_up, b2)


def _conv5(x, w25, bias, hw_mask, *, wp):
    """5x5x5 conv, padding=2, on padded depth-major activations.

    x       [N, Ds, C, Sp] (f32 or bf16), Sp = Hp*Wp, zero H/W borders.
    w25     [25, O, 5*C] bf16  (tap index = kh*5+kw, column = kd*C + c).
    Returns y [N, Ds, O, Sp] f32 (borders zeroed) and packed stats [N, Ds, O, 2].
    """
    N, Ds, C, Sp = x.shape
    O = w25.shape[1]
    K5 = w25.shape[2]

    def kernel(x0, x1, x2, x3, x4, w_ref, b_ref, m_ref, y_ref, st_ref):
        d = pl.program_id(1)
        nds = pl.num_programs(1)
        # haloed depth window: 5 overlapping per-depth views; zero the out-of-range ones.
        slabs = []
        for kd, xr in enumerate((x0, x1, x2, x3, x4)):
            dd = d + (kd - 2)
            valid = jnp.logical_and(dd >= 0, dd < nds)
            s = xr[...].astype(jnp.bfloat16)
            slabs.append(jnp.where(valid, s, jnp.zeros_like(s)))
        x5 = jnp.concatenate(slabs, axis=0)                 # (5C, Sp) bf16
        acc = jnp.zeros((O, Sp), jnp.float32)
        for kh in range(KERNEL):
            for kw in range(KERNEL):
                off = (kh - 2) * wp + (kw - 2)
                xs = _roll_lanes(x5, off)                   # lane shift; XLU, overlaps MXU
                acc = acc + jnp.dot(w_ref[kh * KERNEL + kw], xs,
                                    preferred_element_type=jnp.float32)
        y = (acc + b_ref[...]) * m_ref[...]                 # zero the padded H/W border
        y_ref[...] = y
        s = jnp.sum(y, axis=1, keepdims=True)
        q = jnp.sum(y * y, axis=1, keepdims=True)
        st_ref[...] = jnp.concatenate([s, q], axis=1)

    def xspec(kd):
        return pl.BlockSpec(
            (None, None, C, Sp),
            lambda n, d, kd=kd: (n, jnp.minimum(jnp.maximum(d + kd - 2, 0), Ds - 1), 0, 0))

    return pl.pallas_call(
        kernel,
        grid=(N, Ds),
        in_specs=[xspec(0), xspec(1), xspec(2), xspec(3), xspec(4),
                  pl.BlockSpec((KERNEL * KERNEL, O, K5), lambda n, d: (0, 0, 0)),
                  pl.BlockSpec((O, 1), lambda n, d: (0, 0)),
                  pl.BlockSpec((1, Sp), lambda n, d: (0, 0))],
        out_specs=[pl.BlockSpec((None, None, O, Sp), lambda n, d: (n, d, 0, 0)),
                   pl.BlockSpec((None, None, O, 2), lambda n, d: (n, d, 0, 0))],
        out_shape=(jax.ShapeDtypeStruct((N, Ds, O, Sp), jnp.float32),
                   jax.ShapeDtypeStruct((N, Ds, O, 2), jnp.float32)),
        compiler_params=pltpu.CompilerParams(
            dimension_semantics=("parallel", "parallel"),
            vmem_limit_bytes=_VMEM_LIMIT),
    )(x, x, x, x, x, w25, bias, hw_mask)


def _apply_cat(up_p, skip_p, scale, shift, dmask, hw_mask, *, td):
    N, Ds, Oh, Sp = up_p.shape
    Cs = skip_p.shape[2]
    C = Oh + Cs
    nt = Ds // td
    return pl.pallas_call(
        _cat_kernel,
        grid=(N, nt),
        in_specs=[
            pl.BlockSpec((None, td, Oh, Sp), lambda n, t: (n, t, 0, 0)),
            pl.BlockSpec((None, td, Cs, Sp), lambda n, t: (n, t, 0, 0)),
            pl.BlockSpec((Oh, 1), lambda n, t: (0, 0)),
            pl.BlockSpec((Oh, 1), lambda n, t: (0, 0)),
            pl.BlockSpec((None, Cs, 1), lambda n, t: (n, 0, 0)),
            pl.BlockSpec((1, Sp), lambda n, t: (0, 0)),
        ],
        out_specs=pl.BlockSpec((None, td, C, Sp), lambda n, t: (n, t, 0, 0)),
        out_shape=jax.ShapeDtypeStruct((N, Ds, C, Sp), jnp.float32),
        compiler_params=pltpu.CompilerParams(
            dimension_semantics=("parallel", "parallel"),
            vmem_limit_bytes=_VMEM_LIMIT),
    )(up_p, skip_p, scale, shift, dmask, hw_mask)


def _apply_bn_elu(y, scale, shift, hw_mask, *, td):
    N, Ds, C, Sp = y.shape
    nt = Ds // td
    return pl.pallas_call(
        _bn_elu_kernel,
        grid=(N, nt),
        in_specs=[
            pl.BlockSpec((None, td, C, Sp), lambda n, t: (n, t, 0, 0)),
            pl.BlockSpec((C, 1), lambda n, t: (0, 0)),
            pl.BlockSpec((C, 1), lambda n, t: (0, 0)),
            pl.BlockSpec((1, Sp), lambda n, t: (0, 0)),
        ],
        out_specs=pl.BlockSpec((None, td, C, Sp), lambda n, t: (n, t, 0, 0)),
        out_shape=jax.ShapeDtypeStruct((N, Ds, C, Sp), jnp.bfloat16),   # bf16 intermediate
        compiler_params=pltpu.CompilerParams(
            dimension_semantics=("parallel", "parallel"),
            vmem_limit_bytes=_VMEM_LIMIT),
    )(y, scale, shift, hw_mask)


def _apply_bn_elu_residual(y, res, scale, shift, *, td):
    N, Ds, C, Sp = y.shape
    nt = Ds // td
    return pl.pallas_call(
        _bn_elu_res_kernel,
        grid=(N, nt),
        in_specs=[
            pl.BlockSpec((None, td, C, Sp), lambda n, t: (n, t, 0, 0)),
            pl.BlockSpec((None, td, C, Sp), lambda n, t: (n, t, 0, 0)),
            pl.BlockSpec((C, 1), lambda n, t: (0, 0)),
            pl.BlockSpec((C, 1), lambda n, t: (0, 0)),
        ],
        out_specs=pl.BlockSpec((None, td, C, Sp), lambda n, t: (n, t, 0, 0)),
        out_shape=jax.ShapeDtypeStruct((N, Ds, C, Sp), jnp.float32),
        compiler_params=pltpu.CompilerParams(
            dimension_semantics=("parallel", "parallel"),
            vmem_limit_bytes=_VMEM_LIMIT),
    )(y, res, scale, shift)


# ----------------------------------------------------------------------- module forward
def up_transition_forward(x, skipx, drop_mask,
                          up_w, up_b, bn1_g, bn1_b,
                          conv_ws, conv_bs, bn_gs, bn_bs):
    """UpTransition forward.  drop_mask: [N, C_skip] Dropout3d mask already scaled by 1/(1-p)."""
    N, Cin, D, H, W = x.shape
    Oh = up_w.shape[1]                          # outChans // 2
    Ns, Cs, Ds, Hs, Ws = skipx.shape
    assert Ns == N and (Ds, Hs, Ws) == (2 * D, 2 * H, 2 * W)
    assert Oh % 8 == 0 and Cs % 8 == 0, "channel halves must be sublane (8) multiples"
    S_in, S_out = D * H * W, Ds * Hs * Ws
    Hp, Wp = Hs + 2 * PAD, Ws + 2 * PAD
    Sp = Hp * Wp
    C_cat = Oh + Cs
    assert len(conv_ws) >= 1                    # TODO(synk): nConvs == 0 path not implemented
    assert conv_ws[0].shape[0] == C_cat and conv_ws[0].shape[1] == C_cat

    td = _pick_td(Ds)
    # H/W border mask of the padded plane (zero border after BN shift / bias).
    hw_mask = jnp.pad(jnp.ones((Hs, Ws), jnp.float32),
                      ((PAD, PAD), (PAD, PAD))).reshape(1, Sp)

    # ---- 1) ConvTranspose3d(k=2,s=2) as an 8-tap matmul + per-(n,tile) BN partial stats
    x_flat = x.reshape(N, Cin, S_in)            # metadata reshape only; cast to bf16 in-kernel
    w_up = jnp.transpose(up_w, (2, 3, 4, 1, 0)).reshape(8 * Oh, Cin).astype(jnp.bfloat16)
    b_up = jnp.tile(up_b, 8)                    # row = tap*Oh + o  -> bias[o]
    y_taps, st = _upconv(x_flat, w_up, b_up, tile_target=2048)

    st = jnp.sum(st, axis=(0, 1)).reshape(8, Oh, 2).sum(axis=0)     # fold taps -> channel
    scale1, shift1 = _bn_scale_shift(st[:, 0], st[:, 1], float(N * S_out), bn1_g, bn1_b)

    # Layout glue (XLA, small up half only): interleave the 8 taps into the 2x upsampled
    # volume and zero-pad H/W into the conv layout.
    # TODO(synk): fuse this interleave into the cat kernel with strided in-kernel stores.
    up5 = (y_taps.reshape(N, 2, 2, 2, Oh, D, H, W)
           .transpose(0, 5, 1, 4, 6, 2, 7, 3)
           .reshape(N, Ds, Oh, Hs, Ws))
    up_p = jnp.pad(up5, ((0, 0), (0, 0), (0, 0), (PAD, PAD), (PAD, PAD))).reshape(N, Ds, Oh, Sp)

    # skip: one fused XLA pass to the depth-major padded layout (kept f32 for the residual add)
    skip_p = jnp.pad(skipx.transpose(0, 2, 1, 3, 4),
                     ((0, 0), (0, 0), (0, 0), (PAD, PAD), (PAD, PAD))).reshape(N, Ds, Cs, Sp)
    dmask = drop_mask.reshape(N, Cs, 1).astype(jnp.float32)

    # ---- 2) fused BN+ELU (up half) + channel dropout (skip half) + concat -> xcat (padded)
    xcat = _apply_cat(up_p, skip_p, scale1, shift1, dmask, hw_mask, td=td)

    # ---- 3) LUConv chain: in-kernel 5x5x5 conv (haloed depth window, 25 shifted matmuls)
    cur = xcat
    n_convs = len(conv_ws)
    out_p = None
    for i in range(n_convs):
        w25 = (jnp.transpose(conv_ws[i], (3, 4, 0, 2, 1))
               .reshape(KERNEL * KERNEL, C_cat, KERNEL * C_cat).astype(jnp.bfloat16))
        bias = conv_bs[i].reshape(C_cat, 1).astype(jnp.float32)
        y, st = _conv5(cur, w25, bias, hw_mask, wp=Wp)
        st = jnp.sum(st, axis=(0, 1))
        scale, shift = _bn_scale_shift(st[:, 0], st[:, 1], float(N * S_out),
                                       bn_gs[i], bn_bs[i])
        if i + 1 < n_convs:
            cur = _apply_bn_elu(y, scale, shift, hw_mask, td=td)          # bf16 activation
        else:
            out_p = _apply_bn_elu_residual(y, xcat, scale, shift, td=td)  # fused residual+ELU

    # unpad + back to NCDHW
    out = (out_p.reshape(N, Ds, C_cat, Hp, Wp)[:, :, :, PAD:PAD + Hs, PAD:PAD + Ws]
           .transpose(0, 2, 1, 3, 4))
    return out


# -------------------------------------------------------------- pure-JAX reference check
def reference(x, skipx, drop_mask, up_w, up_b, bn1_g, bn1_b, conv_ws, conv_bs, bn_gs, bn_bs):
    def elu(v):
        return jnp.where(v > 0, v, jnp.exp(v) - 1.0)

    def bn_train(y, g, b):
        mean = y.mean(axis=(0, 2, 3, 4), keepdims=True)
        var = y.var(axis=(0, 2, 3, 4), keepdims=True)
        return ((y - mean) * lax.rsqrt(var + EPS)
                * g.reshape(1, -1, 1, 1, 1) + b.reshape(1, -1, 1, 1, 1))

    # ConvTranspose3d(k=2,s=2) == lhs-dilated conv with spatially flipped kernel, I/O swapped
    w_conv = jnp.flip(up_w, axis=(2, 3, 4)).transpose(1, 0, 2, 3, 4)
    up = lax.conv_general_dilated(
        x.astype(jnp.bfloat16), w_conv.astype(jnp.bfloat16),
        window_strides=(1, 1, 1), padding=[(1, 1)] * 3, lhs_dilation=(2, 2, 2),
        dimension_numbers=("NCDHW", "OIDHW", "NCDHW"),
        preferred_element_type=jnp.float32) + up_b.reshape(1, -1, 1, 1, 1)
    up = elu(bn_train(up, bn1_g, bn1_b))
    skipdo = skipx * drop_mask[:, :, None, None, None]
    xcat = jnp.concatenate([up, skipdo], axis=1)

    out = xcat
    for w, b, g, be in zip(conv_ws, conv_bs, bn_gs, bn_bs):
        conv = lax.conv_general_dilated(
            out.astype(jnp.bfloat16), w.astype(jnp.bfloat16),
            window_strides=(1, 1, 1), padding=[(PAD, PAD)] * 3,
            dimension_numbers=("NCDHW", "OIDHW", "NCDHW"),
            preferred_element_type=jnp.float32) + b.reshape(1, -1, 1, 1, 1)
        out = elu(bn_train(conv, g, be))
    return elu(out + xcat)


if __name__ == "__main__":
    key = jax.random.PRNGKey(0)
    keys = jax.random.split(key, 12)

    # UpTransition(inChans=16, outChans=16, nConvs=2, elu=True, dropout=False)
    N = 2
    in_chans = 16
    out_chans = 16
    n_convs = 2
    o_half = out_chans // 2
    c_skip = out_chans - o_half
    D = H = W = 8                       # x spatial; skip / output spatial is 2x -> 16^3

    x = jax.random.normal(keys[0], (N, in_chans, D, H, W), dtype=jnp.float32)
    skipx = jax.random.normal(keys[1], (N, c_skip, 2 * D, 2 * H, 2 * W), dtype=jnp.float32)

    # Dropout3d(p=0.5) in training mode: per-(sample, channel) keep mask scaled by 1/(1-p)
    drop_mask = jax.random.bernoulli(keys[2], 0.5, (N, c_skip)).astype(jnp.float32) * 2.0

    # ConvTranspose3d weight [in, out, 2, 2, 2]; BN affine at init (gamma=1, beta=0)
    up_w = 0.1 * jax.random.normal(keys[3], (in_chans, o_half, 2, 2, 2), dtype=jnp.float32)
    up_b = 0.01 * jax.random.normal(keys[4], (o_half,), dtype=jnp.float32)
    bn1_g = jnp.ones((o_half,), jnp.float32)
    bn1_b = jnp.zeros((o_half,), jnp.float32)

    conv_ws, conv_bs, bn_gs, bn_bs = [], [], [], []
    for i in range(n_convs):
        conv_ws.append(0.03 * jax.random.normal(
            keys[5 + 2 * i], (out_chans, out_chans, KERNEL, KERNEL, KERNEL), dtype=jnp.float32))
        conv_bs.append(0.01 * jax.random.normal(keys[6 + 2 * i], (out_chans,), dtype=jnp.float32))
        bn_gs.append(jnp.ones((out_chans,), jnp.float32))
        bn_bs.append(jnp.zeros((out_chans,), jnp.float32))

    out = up_transition_forward(x, skipx, drop_mask, up_w, up_b, bn1_g, bn1_b,
                                conv_ws, conv_bs, bn_gs, bn_bs)
    out = jax.block_until_ready(out)

    ref = reference(x, skipx, drop_mask, up_w, up_b, bn1_g, bn1_b,
                    conv_ws, conv_bs, bn_gs, bn_bs)
    max_err = float(jnp.max(jnp.abs(out - ref)))
    # 5e-3 covers bf16 conv-input rounding / accumulation-order differences vs XLA conv.
    if max_err > 5e-3:
        raise AssertionError(f"Pallas output mismatch vs reference: max abs err = {max_err}")

    print("KERNEL_OK")
</pallas_src>

<mosaic_0001>
module attributes {stable_mosaic.version = 11 : i64} {
  func.func @_upconv_kernel(%arg0: i32, %arg1: i32, %arg2: memref<1x16x256xf32, #tpu.memory_space<vmem>>, %arg3: memref<64x16xbf16, #tpu.memory_space<vmem>>, %arg4: memref<64x1xf32, #tpu.memory_space<vmem>>, %arg5: memref<1x64x256xf32, #tpu.memory_space<vmem>>, %arg6: memref<1x1x64x2xf32, #tpu.memory_space<vmem>>) attributes {dimension_semantics = [#tpu.dimension_semantics<parallel>, #tpu.dimension_semantics<parallel>], iteration_bounds = array<i64: 2, 2>, scalar_prefetch = 0 : i64, scratch_operands = 0 : i64, tpu.core_type = #tpu.core_type<tc>, window_params = [{transform_indices = @transform_0, window_bounds = array<i64: 1, 16, 256>}, {pipeline_mode = #tpu.pipeline_mode<synchronous>, transform_indices = @transform_1, window_bounds = array<i64: 64, 16>}, {pipeline_mode = #tpu.pipeline_mode<synchronous>, transform_indices = @transform_2, window_bounds = array<i64: 64, 1>}, {transform_indices = @transform_3, window_bounds = array<i64: 1, 64, 256>}, {transform_indices = @transform_4, window_bounds = array<i64: 1, 1, 64, 2>}]} {
    %c0 = arith.constant 0 : index
    %c0_0 = arith.constant 0 : index
    %c0_1 = arith.constant 0 : index
    %0 = vector.load %arg2[%c0, %c0_0, %c0_1] : memref<1x16x256xf32, #tpu.memory_space<vmem>>, vector<1x16x256xf32>
    %1 = vector.shape_cast %0 : vector<1x16x256xf32> to vector<16x256xf32>
    %2 = arith.truncf %1 : vector<16x256xf32> to vector<16x256xbf16>
    %c0_2 = arith.constant 0 : index
    %c0_3 = arith.constant 0 : index
    %3 = vector.load %arg3[%c0_2, %c0_3] : memref<64x16xbf16, #tpu.memory_space<vmem>>, vector<64x16xbf16>
    %cst = arith.constant dense<0.000000e+00> : vector<64x256xf32>
    %4 = tpu.matmul %3, %2, %cst {dimension_numbers = #tpu.dot_dimension_numbers<[1], [0], [0], [1], [0, 0, 1, 1], [], []>} : vector<64x16xbf16>, vector<16x256xbf16>, vector<64x256xf32> -> vector<64x256xf32>
    %c0_4 = arith.constant 0 : index
    %c0_5 = arith.constant 0 : index
    %5 = vector.load %arg4[%c0_4, %c0_5] : memref<64x1xf32, #tpu.memory_space<vmem>>, vector<64x1xf32>
    %6 = vector.broadcast %5 : vector<64x1xf32> to vector<64x256xf32>
    %7 = arith.addf %4, %6 : vector<64x256xf32>
    %c0_6 = arith.constant 0 : index
    %c0_7 = arith.constant 0 : index
    %c0_8 = arith.constant 0 : index
    %8 = vector.load %arg5[%c0_6, %c0_7, %c0_8] : memref<1x64x256xf32, #tpu.memory_space<vmem>>, vector<1x64x256xf32>
    %9 = vector.shape_cast %8 : vector<1x64x256xf32> to vector<64x256xf32>
    %10 = vector.shape_cast %7 : vector<64x256xf32> to vector<1x64x256xf32>
    tpu.vector_store %arg5[%c0_6, %c0_7, %c0_8], %10 {strides = array<i32>} : memref<1x64x256xf32, #tpu.memory_space<vmem>>, vector<1x64x256xf32>,
    %cst_9 = arith.constant dense<0.000000e+00> : vector<64xf32>
    %11 = vector.multi_reduction <add>, %7, %cst_9 [1] : vector<64x256xf32> to vector<64xf32>
    %12 = vector.shape_cast %11 : vector<64xf32> to vector<64x1xf32>
    %13 = arith.mulf %7, %7 : vector<64x256xf32>
    %cst_10 = arith.constant dense<0.000000e+00> : vector<64xf32>
    %14 = vector.multi_reduction <add>, %13, %cst_10 [1] : vector<64x256xf32> to vector<64xf32>
    %15 = vector.shape_cast %14 : vector<64xf32> to vector<64x1xf32>
    %16 = tpu.concatenate %12, %15 in 1 : vector<64x1xf32>, vector<64x1xf32> -> vector<64x2xf32>
    %c0_11 = arith.constant 0 : index
    %c0_12 = arith.constant 0 : index
    %c0_13 = arith.constant 0 : index
    %c0_14 = arith.constant 0 : index
    %17 = vector.load %arg6[%c0_11, %c0_12, %c0_13, %c0_14] : memref<1x1x64x2xf32, #tpu.memory_space<vmem>>, vector<1x1x64x2xf32>
    %18 = vector.shape_cast %17 : vector<1x1x64x2xf32> to vector<64x2xf32>
    %19 = vector.shape_cast %16 : vector<64x2xf32> to vector<1x1x64x2xf32>
    tpu.vector_store %arg6[%c0_11, %c0_12, %c0_13, %c0_14], %19 {strides = array<i32>} : memref<1x1x64x2xf32, #tpu.memory_space<vmem>>, vector<1x1x64x2xf32>,
    return
  }
  func.func @transform_0(%arg0: i32, %arg1: i32) -> (i32, i32, i32) {
    %c0_i32 = arith.constant 0 : i32
    %c0_i32_0 = arith.constant 0 : i32
    return %arg0, %c0_i32, %arg1 : i32, i32, i32
  }
  func.func @transform_1(%arg0: i32, %arg1: i32) -> (i32, i32) {
    %c0_i32 = arith.constant 0 : i32
    %c0_i32_0 = arith.constant 0 : i32
    %c0_i32_1 = arith.constant 0 : i32
    return %c0_i32, %c0_i32_0 : i32, i32
  }
  func.func @transform_2(%arg0: i32, %arg1: i32) -> (i32, i32) {
    %c0_i32 = arith.constant 0 : i32
    %c0_i32_0 = arith.constant 0 : i32
    %c0_i32_1 = arith.constant 0 : i32
    return %c0_i32, %c0_i32_0 : i32, i32
  }
  func.func @transform_3(%arg0: i32, %arg1: i32) -> (i32, i32, i32) {
    %c0_i32 = arith.constant 0 : i32
    %c0_i32_0 = arith.constant 0 : i32
    return %arg0, %c0_i32, %arg1 : i32, i32, i32
  }
  func.func @transform_4(%arg0: i32, %arg1: i32) -> (i32, i32, i32, i32) {
    %c0_i32 = arith.constant 0 : i32
    %c0_i32_0 = arith.constant 0 : i32
    %c0_i32_1 = arith.constant 0 : i32
    return %arg0, %arg1, %c0_i32, %c0_i32_0 : i32, i32, i32, i32
  }
}

</mosaic_0001>

<llo_original>
// kernel: tpu_custom_call.1
$region0: #{tpu_custom_call.1}
  #allocation0 [shape = 'u32[]', space=smem, size = 0x4, offset = 0x4, fixed_abs, tag = 'smem constant byte address 0x4 - core index']
  #allocation1 [shape = 'u32[72,128]{1,0:T(1,128)}', space=vmem, size = 0x9000, scoped, tag = 'internal scratch']
  %s0 = inlined_call_operand.hbm [shape: f32[2,16,512], index: 0, kind: input, shape index: {}]
  %s1 = inlined_call_operand.vmem [shape: bf16[64,16], index: 1, kind: input, shape index: {}]
  %s2 = inlined_call_operand.vmem [shape: f32[64,1], index: 2, kind: input, shape index: {}]
  %s3 = inlined_call_operand.hbm [shape: f32[2,64,512], index: 3, kind: output, shape index: {0}]
  %s4 = inlined_call_operand.vmem [shape: f32[2,2,64,2], index: 4, kind: output, shape index: {1}]
  %5 = xla_tuple %s3, %s4
  %s6 = sld [smem:[#allocation0]]
  $region57: #{tpu_custom_call.1} parent=0
    _
  %s8 = ssub.s32 1, %s6
  %s9 = scalar_select 0, %s8, %s6
  $region1: #{tpu_custom_call.1} parent=0
    #allocation2 [shape = 'u8[32768]{0}', space=vmem, size = 0x8000, scoped, tag = 'input window, operand 0']
    #allocation3 [shape = 's32[2]{0}', space=sflag, size = 0x8, scoped, tag = 'scoped memory for tpu_custom_call.1']
    #allocation4 [shape = 's32[2]{0}', space=sflag, size = 0x8, scoped, tag = 'scoped memory for tpu_custom_call.1']
    #allocation5 [shape = 'u8[131072]{0}', space=vmem, size = 0x20000, scoped, tag = 'output window, operand 0']
    %10 = vsyncpa [#allocation3], 0
    %s11 = scalar_lea.sflag [#allocation3], 1
    %12 = vsyncpa %s11, 0
    %13 = vsyncpa [#allocation4], 0
    %s14 = scalar_lea.sflag [#allocation4], 1
    %15 = vsyncpa %s14, 0
    loop: start=0, step=1, limit=6
    $region2: #{tpu_custom_call.1} parent=1 // loop_pre_header
      _
    $region3: #{tpu_custom_call.1} parent=1 // loop_header
      %s17 = sphi 0, %s21
      %p18 = scmp.ge.s32.totalorder %s17, 6
      %s24 = sphi 0, %s36
      %s25 = sphi 0, %s32
      %s26 = sphi 0, %s24
      %s27 = sphi 0, %s25
      %s28 = sphi 0, %s26
      %s29 = sphi 0, %s27
      %s41 = sphi 0, %s43
      %s44 = sphi 0, %s41
      %s45 = sphi 0, %s44
      %s61 = sphi 0, %s45
      %s65 = sphi 0, %s65
      %s67 = sphi 0, %s65
      %s68 = sphi 0, %s67
      %s82 = sphi 0, %s68
      %s86 = sphi 0, %s86
      %s88 = sphi 0, %s86
      %s89 = sphi 0, %s88
      %s103 = sphi 0, %s89
      %s111 = sphi 0, %s113
      %s114 = sphi 0, %s111
      %s115 = sphi 0, %s114
      %s131 = sphi 0, %s115
      %s139 = sphi 0, %s141
      %s142 = sphi 0, %s139
      %s143 = sphi 0, %s142
      %s159 = sphi 0, %s143
    $region4: #{tpu_custom_call.1} parent=1 // loop_header_branch
      %20 = sbr.rel (%p18) target = $region8
    $region5: #{tpu_custom_call.1} parent=1 // loop_body
      %s22 = ssub.s32 %s17, 1
      %s23 = ssub.s32 %s17, 2
      %s30 = sadd.s32 1, %s25
      %p31 = scmp.ge.s32.totalorder %s30, 2
      %s32 = scalar_select %p31, 0, %s30
      %s33 = sadd.s32 1, %s24
      %s34 = scalar_select %p31, %s33, %s24
      %p35 = scmp.ge.s32.totalorder %s34, 2
      %s36 = scalar_select %p35, 0, %s34
      %s37 = ssub.s32 %s24, %s36
      %s38 = ssub.s32 %s25, %s32
      %s39 = sor.u32 %s37, %s38
      %p40 = scmp.eq.s32.totalorder %s39, 0
      %s42 = sadd.s32 %s41, 1
      %s43 = scalar_select %p40, %s41, %s42
      %p46 = pneg %p40
      %p47 = scmp.eq.s32.totalorder %s17, 3
      %p48 = por %p46, %p47
      %p49 = scmp.ne.s32.totalorder %s41, %s44
      %p50 = scmp.eq.s32.totalorder %s17, 0
      %p51 = por %p49, %p50
      %p52 = scmp.ne.s32.totalorder %s41, %s44
      %p53 = scmp.eq.s32.totalorder %s22, 3
      %p54 = por %p52, %p53
      %p55 = scmp.ne.s32.totalorder %s44, %s45
      %p56 = scmp.eq.s32.totalorder %s22, 0
      %p57 = por %p55, %p56
      %p58 = scmp.ne.s32.totalorder %s44, %s45
      %p59 = scmp.eq.s32.totalorder %s23, 3
      %p60 = por %p58, %p59
      %p62 = scmp.ne.s32.totalorder %s45, %s61
      %p63 = scmp.eq.s32.totalorder %s23, 0
      %p64 = por %p62, %p63
      %s66 = sadd.s32 %s65, 1
      %p69 = scmp.eq.s32.totalorder %s17, 3
      %p70 = scmp.ne.s32.totalorder %s65, %s67
      %p71 = scmp.eq.s32.totalorder %s17, 0
      %p72 = por %p70, %p71
      %p73 = scmp.ne.s32.totalorder %s65, %s67
      %p74 = scmp.eq.s32.totalorder %s22, 3
      %p75 = por %p73, %p74
      %p76 = scmp.ne.s32.totalorder %s67, %s68
      %p77 = scmp.eq.s32.totalorder %s22, 0
      %p78 = por %p76, %p77
      %p79 = scmp.ne.s32.totalorder %s67, %s68
      %p80 = scmp.eq.s32.totalorder %s23, 3
      %p81 = por %p79, %p80
      %p83 = scmp.ne.s32.totalorder %s68, %s82
      %p84 = scmp.eq.s32.totalorder %s23, 0
      %p85 = por %p83, %p84
      %s87 = sadd.s32 %s86, 1
      %p90 = scmp.eq.s32.totalorder %s17, 3
      %p91 = scmp.ne.s32.totalorder %s86, %s88
      %p92 = scmp.eq.s32.totalorder %s17, 0
      %p93 = por %p91, %p92
      %p94 = scmp.ne.s32.totalorder %s86, %s88
      %p95 = scmp.eq.s32.totalorder %s22, 3
      %p96 = por %p94, %p95
      %p97 = scmp.ne.s32.totalorder %s88, %s89
      %p98 = scmp.eq.s32.totalorder %s22, 0
      %p99 = por %p97, %p98
      %p100 = scmp.ne.s32.totalorder %s88, %s89
      %p101 = scmp.eq.s32.totalorder %s23, 3
      %p102 = por %p100, %p101
      %p104 = scmp.ne.s32.totalorder %s89, %s103
      %p105 = scmp.eq.s32.totalorder %s23, 0
      %p106 = por %p104, %p105
      %s107 = ssub.s32 %s24, %s36
      %s108 = ssub.s32 %s25, %s32
      %s109 = sor.u32 %s107, %s108
      %p110 = scmp.eq.s32.totalorder %s109, 0
      %s112 = sadd.s32 %s111, 1
      %s113 = scalar_select %p110, %s111, %s112
      %p116 = pneg %p110
      %p117 = scmp.eq.s32.totalorder %s17, 3
      %p118 = por %p116, %p117
      %p119 = scmp.ne.s32.totalorder %s111, %s114
      %p120 = scmp.eq.s32.totalorder %s17, 0
      %p121 = por %p119, %p120
      %p122 = scmp.ne.s32.totalorder %s111, %s114
      %p123 = scmp.eq.s32.totalorder %s22, 3
      %p124 = por %p122, %p123
      %p125 = scmp.ne.s32.totalorder %s114, %s115
      %p126 = scmp.eq.s32.totalorder %s22, 0
      %p127 = por %p125, %p126
      %p128 = scmp.ne.s32.totalorder %s114, %s115
      %p129 = scmp.eq.s32.totalorder %s23, 3
      %p130 = por %p128, %p129
      %p132 = scmp.ne.s32.totalorder %s115, %s131
      %p133 = scmp.eq.s32.totalorder %s23, 0
      %p134 = por %p132, %p133
      %s135 = ssub.s32 %s24, %s36
      %s136 = ssub.s32 %s25, %s32
      %s137 = sor.u32 %s135, %s136
      %p138 = scmp.eq.s32.totalorder %s137, 0
      %s140 = sadd.s32 %s139, 1
      %s141 = scalar_select %p138, %s139, %s140
      %p144 = pneg %p138
      %p145 = scmp.eq.s32.totalorder %s17, 3
      %p146 = por %p144, %p145
      %p147 = scmp.ne.s32.totalorder %s139, %s142
      %p148 = scmp.eq.s32.totalorder %s17, 0
      %p149 = por %p147, %p148
      %p150 = scmp.ne.s32.totalorder %s139, %s142
      %p151 = scmp.eq.s32.totalorder %s22, 3
      %p152 = por %p150, %p151
      %p153 = scmp.ne.s32.totalorder %s142, %s143
      %p154 = scmp.eq.s32.totalorder %s22, 0
      %p155 = por %p153, %p154
      %p156 = scmp.ne.s32.totalorder %s142, %s143
      %p157 = scmp.eq.s32.totalorder %s23, 3
      %p158 = por %p156, %p157
      %p160 = scmp.ne.s32.totalorder %s143, %s159
      %p161 = scmp.eq.s32.totalorder %s23, 0
      %p162 = por %p160, %p161
      %p163 = scmp.le.s32.totalorder 1, %s17
      %p164 = scmp.lt.s32.totalorder %s17, 5
      %p165 = pnand %p163, %p164
      %p166 = pneg %p165
      // Predicated region
      $region9: #{tpu_custom_call.1} parent=5 // pred_check
        _
      $region10: #{tpu_custom_call.1} parent=5 // pred_check_branch
        %168 = sbr.rel (%p165) target = $region12
      $region11: #{tpu_custom_call.1} parent=5 // pred_region
        %s169 = ssub.s32 %s17, 1
        // Predicated region
        $region13: #{tpu_custom_call.1} parent=11 // pred_check
          %p170 = pneg %p78
        $region14: #{tpu_custom_call.1} parent=11 // pred_check_branch
          %172 = sbr.rel (%p170) target = $region16
        $region15: #{tpu_custom_call.1} parent=11 // pred_region
          _
        $region16: #{tpu_custom_call.1} parent=11 // pred_fallthru
          _
        // Predicated region
        $region17: #{tpu_custom_call.1} parent=11 // pred_check
          %p173 = pneg %p99
        $region18: #{tpu_custom_call.1} parent=11 // pred_check_branch
          %175 = sbr.rel (%p173) target = $region20
        $region19: #{tpu_custom_call.1} parent=11 // pred_region
          _
        $region20: #{tpu_custom_call.1} parent=11 // pred_fallthru
          _
      $region12: #{tpu_custom_call.1} parent=5 // pred_fallthru
        _
      %p176 = scmp.lt.s32.totalorder %s17, 4
      // Predicated region
      $region21: #{tpu_custom_call.1} parent=5 // pred_check
        %p177 = pneg %p176
      $region22: #{tpu_custom_call.1} parent=5 // pred_check_branch
        %179 = sbr.rel (%p177) target = $region24
      $region23: #{tpu_custom_call.1} parent=5 // pred_region
        // Predicated region
        $region25: #{tpu_custom_call.1} parent=23 // pred_check
          %p180 = pneg %p51
        $region26: #{tpu_custom_call.1} parent=23 // pred_check_branch
          %182 = sbr.rel (%p180) target = $region28
        $region27: #{tpu_custom_call.1} parent=23 // pred_region
          %s183 = sand.u32 %s41, 1
          %s184 = scalar_lea.sflag [#allocation3], %s183
          %s185 = sand.u32 %s41, 1
          %s186 = smul.addr %s185, 32
          %s187 = scalar_lea.vmem [#allocation2], %s186
          %s188 = smul.u32 2, %s25
          %190 = vsyncadd %s184, 0
          %s191 = smul.addr %s24, 8
          %s192 = sadd.s32 %s188, %s191
          %s193 = smul.addr %s192, 8
          %s194 = scalar_lea.hbm %s0, %s193
          %s195 = sshll.u32 %s194, 4
          %s196 = int_to_ptr.hbm [resolvable:$true] %s195
          %s197 = sshll.u32 %s187, 4
          %s198 = int_to_ptr.vmem [resolvable:$true] %s197
          %203 = dma.hbm_to_vmem [thread:$0]  %s196, 512, %s198, %s184, 512, 256, 16
        $region28: #{tpu_custom_call.1} parent=23 // pred_fallthru
          _
      $region24: #{tpu_custom_call.1} parent=5 // pred_fallthru
        _
      %p204 = scmp.le.s32.totalorder 1, %s17
      %p205 = scmp.lt.s32.totalorder %s17, 5
      %p206 = pnand %p204, %p205
      %p207 = pneg %p206
      // Predicated region
      $region29: #{tpu_custom_call.1} parent=5 // pred_check
        _
      $region30: #{tpu_custom_call.1} parent=5 // pred_check_branch
        %209 = sbr.rel (%p206) target = $region32
      $region31: #{tpu_custom_call.1} parent=5 // pred_region
        %s210 = ssub.s32 %s17, 1
        %s211 = sand.u32 %s44, 1
        %s212 = scalar_lea.sflag [#allocation3], %s211
        %s213 = sand.u32 %s44, 1
        %s214 = smul.addr %s213, 32
        %s215 = scalar_lea.vmem [#allocation2], %s214
        // Predicated region
        $region33: #{tpu_custom_call.1} parent=31 // pred_check
          %p216 = pneg %p57
        $region34: #{tpu_custom_call.1} parent=31 // pred_check_branch
          %218 = sbr.rel (%p216) target = $region36
        $region35: #{tpu_custom_call.1} parent=31 // pred_region
          %220 = dma.done %s212, 512
        $region36: #{tpu_custom_call.1} parent=31 // pred_fallthru
          _
        %s221 = sand.u32 %s44, 1
        %s222 = scalar_lea.sflag [#allocation3], %s221
        %s223 = sand.u32 %s44, 1
        %s224 = smul.addr %s223, 32
        %s225 = scalar_lea.vmem [#allocation2], %s224
        %p226 = pneg %p57
        %p227 = pneg %p54
        %p228 = pneg %p78
        %p229 = pneg %p75
        %p230 = pneg %p99
        %p231 = pneg %p96
        %p232 = pneg %p127
        %p233 = pneg %p124
        %s234 = sand.u32 %s114, 1
        %s235 = scalar_lea.sflag [#allocation4], %s234
        %s236 = sand.u32 %s114, 1
        %s237 = smul.addr %s236, 128
        %s238 = scalar_lea.vmem [#allocation5], %s237
        %p239 = pneg %p155
        %p240 = pneg %p152
        %p241 = scmp.lt.s32.totalorder %s26, 1
        %s242 = scalar_select %p241, %s26, 1
        %p243 = scmp.lt.s32.totalorder %s27, 1
        %s244 = scalar_select %p243, %s27, 1
        %s245 = smul.addr %s244, 8
        %s246 = smul.addr %s242, 16
        %s247 = sadd.s32 %s245, %s246
        %s248 = smul.addr %s247, 8
        %s249 = scalar_lea.vmem %s4, %s248
        %s250 = smul.u32 2, %s27
        %s251 = smul.u32 2, %s27
        %p252 = scmp.lt.s32.totalorder %s26, 1
        %s253 = scalar_select %p252, %s26, 1
        %p254 = scmp.lt.s32.totalorder %s27, 1
        %s255 = scalar_select %p254, %s27, 1
        %s256 = smul.addr %s255, 8
        %s257 = smul.addr %s253, 16
        %s258 = sadd.s32 %s256, %s257
        %s259 = smul.addr %s258, 8
        %s260 = scalar_lea.vmem %s4, %s259
        %v262 = vld [vmem:[%s215] sm:$0xff]
        %v263 = vld [vmem:[%s215 + $0x8] sm:$0xff]
        %v264 = vld [vmem:[%s215 + $0x10] sm:$0xff]
        %v265 = vld [vmem:[%s215 + $0x18] sm:$0xff]
        %v266 = vpack.c.bf16 %v264, %v262
        %v267 = vpack.c.bf16 %v265, %v263
        %v268 = vld [vmem:[%s1] sm:$0xf]
        %v269 = vld [vmem:[%s1 + $0x4] sm:$0xf]
        %v270 = vld [vmem:[%s1 + $0x8] sm:$0xf]
        %v271 = vld [vmem:[%s1 + $0xc] sm:$0xf]
        %v272 = vld [vmem:[%s1 + $0x10] sm:$0xf]
        %v273 = vld [vmem:[%s1 + $0x14] sm:$0xf]
        %v274 = vld [vmem:[%s1 + $0x18] sm:$0xf]
        %v275 = vld [vmem:[%s1 + $0x1c] sm:$0xf]
        %v276 = vld [vmem:[%s2] sm:$0xff]
        %v277 = vld [vmem:[%s2 + $0x8] sm:$0xff]
        %v278 = vld [vmem:[%s2 + $0x10] sm:$0xff]
        %v279 = vld [vmem:[%s2 + $0x18] sm:$0xff]
        %v280 = vld [vmem:[%s2 + $0x20] sm:$0xff]
        %v281 = vld [vmem:[%s2 + $0x28] sm:$0xff]
        %v282 = vld [vmem:[%s2 + $0x30] sm:$0xff]
        %v283 = vld [vmem:[%s2 + $0x38] sm:$0xff]
        %285 = vset.pattern.permute.xlu0 0
        %286 = vperm.xlu0 %285, %v276
        %v287 = vpop.permute.xlu0 %286
        %290 = vset.pattern.permute.xlu0 0
        %291 = vperm.xlu0 %290, %v277
        %v292 = vpop.permute.xlu0 %291
        %295 = vset.pattern.permute.xlu0 0
        %296 = vperm.xlu0 %295, %v278
        %v297 = vpop.permute.xlu0 %296
        %300 = vset.pattern.permute.xlu0 0
        %301 = vperm.xlu0 %300, %v279
        %v302 = vpop.permute.xlu0 %301
        %305 = vset.pattern.permute.xlu0 0
        %306 = vperm.xlu0 %305, %v280
        %v307 = vpop.permute.xlu0 %306
        %310 = vset.pattern.permute.xlu0 0
        %311 = vperm.xlu0 %310, %v281
        %v312 = vpop.permute.xlu0 %311
        %315 = vset.pattern.permute.xlu0 0
        %316 = vperm.xlu0 %315, %v282
        %v317 = vpop.permute.xlu0 %316
        %320 = vset.pattern.permute.xlu0 0
        %321 = vperm.xlu0 %320, %v283
        %v322 = vpop.permute.xlu0 %321
        %v332 = vunpack.c.l.b16 %v268
        %v333 = vunpack.c.l.b16 %v269
        %v334 = vunpack.c.l.b16 %v270
        %v335 = vunpack.c.l.b16 %v271
        %v336 = vunpack.c.l.b16 %v272
        %v337 = vunpack.c.l.b16 %v273
        %v338 = vunpack.c.l.b16 %v274
        %v339 = vunpack.c.l.b16 %v275
        %v340 = vpack.c.b16 %v333, %v332
        %v341 = vpack.c.b16 %v335, %v334
        %v342 = vpack.c.b16 %v337, %v336
        %v343 = vpack.c.b16 %v339, %v338
        %vm344 = vcmask 130048
        %v346 = vsel %vm344, %v340, 0
        %v349 = vsel %vm344, %v341, 0
        %v352 = vsel %vm344, %v342, 0
        %v355 = vsel %vm344, %v343, 0
        %357 = vmatpush.bf16.msra.mxu0 0
        %358 = vmatpush.bf16.msra.mxu0 0
        %359 = vmatpush.bf16.msra.mxu0 0
        %360 = vmatpush.bf16.msra.mxu0 0
        %361 = vmatpush.bf16.msra.mxu0 0
        %362 = vmatpush.bf16.msra.mxu0 0
        %363 = vmatpush.bf16.msra.mxu0 0
        %364 = vmatpush.bf16.msra.mxu0 %v266
        %365 = vmatmul.bf16.gmra.mxu0 %v346
        %v366 = vpop.f32.mrf.mxu0
        %v367 = vadd.f32 %v287, %v366
        %v368 = vpop.f32.mrf.mxu0
        %v369 = vadd.f32 %v292, %v368
        %370 = vmatmul.bf16.gmra.mxu0 %v349
        %v371 = vpop.f32.mrf.mxu0
        %v372 = vadd.f32 %v297, %v371
        %v373 = vpop.f32.mrf.mxu0
        %v374 = vadd.f32 %v302, %v373
        %375 = vmatmul.bf16.gmra.mxu0 %v352
        %v376 = vpop.f32.mrf.mxu0
        %v377 = vadd.f32 %v307, %v376
        %v378 = vpop.f32.mrf.mxu0
        %v379 = vadd.f32 %v312, %v378
        %380 = vmatmul.bf16.gmra.mxu0 %v355
        %v381 = vpop.f32.mrf.mxu0
        %v382 = vadd.f32 %v317, %v381
        %v383 = vpop.f32.mrf.mxu0
        %v384 = vadd.f32 %v322, %v383
        %385 = vdwg.mxu0
        %386 = vmatpush.bf16.msra.mxu0 0
        %387 = vmatpush.bf16.msra.mxu0 0
        %388 = vmatpush.bf16.msra.mxu0 0
        %389 = vmatpush.bf16.msra.mxu0 0
        %390 = vmatpush.bf16.msra.mxu0 0
        %391 = vmatpush.bf16.msra.mxu0 0
        %392 = vmatpush.bf16.msra.mxu0 0
        %393 = vmatpush.bf16.msra.mxu0 %v267
        %394 = vmatmul.bf16.gmra.mxu0 %v346
        %v395 = vpop.f32.mrf.mxu0
        %v396 = vadd.f32 %v287, %v395
        %v397 = vpop.f32.mrf.mxu0
        %v398 = vadd.f32 %v292, %v397
        %399 = vmatmul.bf16.gmra.mxu0 %v349
        %v400 = vpop.f32.mrf.mxu0
        %v401 = vadd.f32 %v297, %v400
        %v402 = vpop.f32.mrf.mxu0
        %v403 = vadd.f32 %v302, %v402
        %404 = vmatmul.bf16.gmra.mxu0 %v352
        %v405 = vpop.f32.mrf.mxu0
        %v406 = vadd.f32 %v307, %v405
        %v407 = vpop.f32.mrf.mxu0
        %v408 = vadd.f32 %v312, %v407
        %409 = vmatmul.bf16.gmra.mxu0 %v355
        %v410 = vpop.f32.mrf.mxu0
        %v411 = vadd.f32 %v317, %v410
        %v412 = vpop.f32.mrf.mxu0
        %v413 = vadd.f32 %v322, %v412
        %414 = vdwg.mxu0
        %415 = vst [vmem:[%s238] sm:$0xff] %v367
        %416 = vst [vmem:[%s238 + $0x8] sm:$0xff] %v396
        %417 = vst [vmem:[%s238 + $0x10] sm:$0xff] %v369
        %418 = vst [vmem:[%s238 + $0x18] sm:$0xff] %v398
        %419 = vst [vmem:[%s238 + $0x20] sm:$0xff] %v372
        %420 = vst [vmem:[%s238 + $0x28] sm:$0xff] %v401
        %421 = vst [vmem:[%s238 + $0x30] sm:$0xff] %v374
        %422 = vst [vmem:[%s238 + $0x38] sm:$0xff] %v403
        %423 = vst [vmem:[%s238 + $0x40] sm:$0xff] %v377
        %424 = vst [vmem:[%s238 + $0x48] sm:$0xff] %v406
        %425 = vst [vmem:[%s238 + $0x50] sm:$0xff] %v379
        %426 = vst [vmem:[%s238 + $0x58] sm:$0xff] %v408
        %427 = vst [vmem:[%s238 + $0x60] sm:$0xff] %v382
        %428 = vst [vmem:[%s238 + $0x68] sm:$0xff] %v411
        %429 = vst [vmem:[%s238 + $0x70] sm:$0xff] %v384
        %430 = vst [vmem:[%s238 + $0x78] sm:$0xff] %v413
        %v431 = vadd.f32 %v367, %v396
        %432 = vadd.xlane.f32.xlu0 %v431
        %v433 = vpop.xlane.xlu0 %432
        %v434 = vadd.f32 %v369, %v398
        %435 = vadd.xlane.f32.xlu0 %v434
        %v436 = vpop.xlane.xlu0 %435
        %v437 = vadd.f32 %v372, %v401
        %438 = vadd.xlane.f32.xlu0 %v437
        %v439 = vpop.xlane.xlu0 %438
        %v440 = vadd.f32 %v374, %v403
        %441 = vadd.xlane.f32.xlu0 %v440
        %v442 = vpop.xlane.xlu0 %441
        %v443 = vadd.f32 %v377, %v406
        %444 = vadd.xlane.f32.xlu0 %v443
        %v445 = vpop.xlane.xlu0 %444
        %v446 = vadd.f32 %v379, %v408
        %447 = vadd.xlane.f32.xlu0 %v446
        %v448 = vpop.xlane.xlu0 %447
        %v449 = vadd.f32 %v382, %v411
        %450 = vadd.xlane.f32.xlu0 %v449
        %v451 = vpop.xlane.xlu0 %450
        %v452 = vadd.f32 %v384, %v413
        %453 = vadd.xlane.f32.xlu0 %v452
        %v454 = vpop.xlane.xlu0 %453
        %v455 = vmul.f32 %v367, %v367
        %v456 = vmul.f32 %v396, %v396
        %v457 = vmul.f32 %v369, %v369
        %v458 = vmul.f32 %v398, %v398
        %v459 = vmul.f32 %v372, %v372
        %v460 = vmul.f32 %v401, %v401
        %v461 = vmul.f32 %v374, %v374
        %v462 = vmul.f32 %v403, %v403
        %v463 = vmul.f32 %v377, %v377
        %v464 = vmul.f32 %v406, %v406
        %v465 = vmul.f32 %v379, %v379
        %v466 = vmul.f32 %v408, %v408
        %v467 = vmul.f32 %v382, %v382
        %v468 = vmul.f32 %v411, %v411
        %v469 = vmul.f32 %v384, %v384
        %v470 = vmul.f32 %v413, %v413
        %v471 = vadd.f32 %v455, %v456
        %472 = vadd.xlane.f32.xlu0 %v471
        %v473 = vpop.xlane.xlu0 %472
        %v474 = vadd.f32 %v457, %v458
        %475 = vadd.xlane.f32.xlu0 %v474
        %v476 = vpop.xlane.xlu0 %475
        %v477 = vadd.f32 %v459, %v460
        %478 = vadd.xlane.f32.xlu0 %v477
        %v479 = vpop.xlane.xlu0 %478
        %v480 = vadd.f32 %v461, %v462
        %481 = vadd.xlane.f32.xlu0 %v480
        %v482 = vpop.xlane.xlu0 %481
        %v483 = vadd.f32 %v463, %v464
        %484 = vadd.xlane.f32.xlu0 %v483
        %v485 = vpop.xlane.xlu0 %484
        %v486 = vadd.f32 %v465, %v466
        %487 = vadd.xlane.f32.xlu0 %v486
        %v488 = vpop.xlane.xlu0 %487
        %v489 = vadd.f32 %v467, %v468
        %490 = vadd.xlane.f32.xlu0 %v489
        %v491 = vpop.xlane.xlu0 %490
        %v492 = vadd.f32 %v469, %v470
        %493 = vadd.xlane.f32.xlu0 %v492
        %v494 = vpop.xlane.xlu0 %493
        %vm495 = vcmask 7168
        %v496 = vsel %vm495, %v433, %v473
        %v497 = vsel %vm495, %v436, %v476
        %v498 = vsel %vm495, %v439, %v479
        %v499 = vsel %vm495, %v442, %v482
        %v500 = vsel %vm495, %v445, %v485
        %v501 = vsel %vm495, %v448, %v488
        %v502 = vsel %vm495, %v451, %v491
        %v503 = vsel %vm495, %v454, %v494
        %vm504 = vcmask 15360
        %505 = vst.msk [vmem:[%s260] sm:$0xff] %vm504, %v496
        %506 = vst.msk [vmem:[%s260 + $0x8] sm:$0xff] %vm504, %v497
        %507 = vst.msk [vmem:[%s260 + $0x10] sm:$0xff] %vm504, %v498
        %508 = vst.msk [vmem:[%s260 + $0x18] sm:$0xff] %vm504, %v499
        %509 = vst.msk [vmem:[%s260 + $0x20] sm:$0xff] %vm504, %v500
        %510 = vst.msk [vmem:[%s260 + $0x28] sm:$0xff] %vm504, %v501
        %511 = vst.msk [vmem:[%s260 + $0x30] sm:$0xff] %vm504, %v502
        %512 = vst.msk [vmem:[%s260 + $0x38] sm:$0xff] %vm504, %v503
        %s513 = sand.u32 %s114, 1
        %s514 = scalar_lea.sflag [#allocation4], %s513
        %s515 = sand.u32 %s114, 1
        %s516 = smul.addr %s515, 128
        %s517 = scalar_lea.vmem [#allocation5], %s516
        %p518 = scmp.lt.s32.totalorder %s26, 1
        %s519 = scalar_select %p518, %s26, 1
        %p520 = scmp.lt.s32.totalorder %s27, 1
        %s521 = scalar_select %p520, %s27, 1
        %s522 = smul.addr %s521, 8
        %s523 = smul.addr %s519, 16
        %s524 = sadd.s32 %s522, %s523
        %s525 = smul.addr %s524, 8
        %s526 = scalar_lea.vmem %s4, %s525
        // Predicated region
        $region37: #{tpu_custom_call.1} parent=31 // pred_check
          %p527 = pneg %p124
        $region38: #{tpu_custom_call.1} parent=31 // pred_check_branch
          %529 = sbr.rel (%p527) target = $region40
        $region39: #{tpu_custom_call.1} parent=31 // pred_region
          %s530 = smul.u32 2, %s27
          %532 = vsyncadd %s514, 0
          %s533 = smul.addr %s26, 32
          %s534 = sadd.s32 %s530, %s533
          %s535 = smul.addr %s534, 8
          %s536 = scalar_lea.hbm %s3, %s535
          %s537 = sshll.u32 %s517, 4
          %s538 = int_to_ptr.vmem [resolvable:$true] %s537
          %s539 = sshll.u32 %s536, 4
          %s540 = int_to_ptr.hbm [resolvable:$true] %s539
          %545 = dma.vmem_to_hbm [thread:$0]  %s538, 2048, %s540, %s514, 256, 512, 16
        $region40: #{tpu_custom_call.1} parent=31 // pred_fallthru
          _
        // Predicated region
        $region41: #{tpu_custom_call.1} parent=31 // pred_check
          %p546 = pneg %p152
        $region42: #{tpu_custom_call.1} parent=31 // pred_check_branch
          %548 = sbr.rel (%p546) target = $region44
        $region43: #{tpu_custom_call.1} parent=31 // pred_region
          _
        $region44: #{tpu_custom_call.1} parent=31 // pred_fallthru
          _
      $region32: #{tpu_custom_call.1} parent=5 // pred_fallthru
        _
      %p549 = scmp.le.s32.totalorder 2, %s17
      // Predicated region
      $region45: #{tpu_custom_call.1} parent=5 // pred_check
        %p550 = pneg %p549
      $region46: #{tpu_custom_call.1} parent=5 // pred_check_branch
        %552 = sbr.rel (%p550) target = $region48
      $region47: #{tpu_custom_call.1} parent=5 // pred_region
        %s553 = ssub.s32 %s17, 2
        // Predicated region
        $region49: #{tpu_custom_call.1} parent=47 // pred_check
          %p554 = pneg %p130
        $region50: #{tpu_custom_call.1} parent=47 // pred_check_branch
          %556 = sbr.rel (%p554) target = $region52
        $region51: #{tpu_custom_call.1} parent=47 // pred_region
          %s557 = sand.u32 %s115, 1
          %s558 = scalar_lea.sflag [#allocation4], %s557
          %s559 = sand.u32 %s115, 1
          %s560 = smul.addr %s559, 128
          %s561 = scalar_lea.vmem [#allocation5], %s560
          %563 = dma.done %s558, 2048
        $region52: #{tpu_custom_call.1} parent=47 // pred_fallthru
          _
        // Predicated region
        $region53: #{tpu_custom_call.1} parent=47 // pred_check
          %p564 = pneg %p158
        $region54: #{tpu_custom_call.1} parent=47 // pred_check_branch
          %566 = sbr.rel (%p564) target = $region56
        $region55: #{tpu_custom_call.1} parent=47 // pred_region
          %p567 = scmp.lt.s32.totalorder %s28, 1
          %s568 = scalar_select %p567, %s28, 1
          %p569 = scmp.lt.s32.totalorder %s29, 1
          %s570 = scalar_select %p569, %s29, 1
          %s571 = smul.addr %s570, 8
          %s572 = smul.addr %s568, 16
          %s573 = sadd.s32 %s571, %s572
          %s574 = smul.addr %s573, 8
          %s575 = scalar_lea.vmem %s4, %s574
        $region56: #{tpu_custom_call.1} parent=47 // pred_fallthru
          _
      $region48: #{tpu_custom_call.1} parent=5 // pred_fallthru
        _
    $region6: #{tpu_custom_call.1} parent=1 // loop_footer
      %s21 = sadd.s32 1, %s17
    $region7: #{tpu_custom_call.1} parent=1 // loop_footer_branch
      %16 = sbr.rel target = $region3
    $region8: #{tpu_custom_call.1} parent=1 // loop_exit
      _
    %576 = vsyncpa [#allocation3], 1
    %s577 = scalar_lea.sflag [#allocation3], 1
    %578 = vsyncpa %s577, 1
    %579 = vsyncpa [#allocation4], 1
    %s580 = scalar_lea.sflag [#allocation4], 1
    %581 = vsyncpa %s580, 1

</llo_original>
